<compile_context>
chip_gen: v7x
topology: tpu7x:2x2x1
jax: 0.10.0
libtpu: 0.0.40
codegen_flags: <defaults>
</compile_context>

<pallas_src>
import jax
import jax.numpy as jnp
from jax.experimental import pallas as pl
from jax.experimental.pallas import tpu as pltpu


_TARGET_BLOCK_BYTES = 6 * 1024 * 1024   # ~6 MiB/block -> ~24 MiB double-buffered in+out
_VMEM_LIMIT_BYTES = 32 * 1024 * 1024    # raised scoped VMEM; safe on v5e/v6e/v7x
_TINY_BYTES = 1 * 1024 * 1024           # below this: single whole-array block, no grid
_MIN_TWO_STEP_BYTES = 2 * 1024 * 1024   # above this: force >=2 grid steps (v7x megacore)
_LANE = 128


def _scale_kernel(scale_ref, y_ref, out_ref):
    # scale_ref: SMEM fp32 scalar (shape (1,)); y_ref/out_ref: VMEM tiles.
    out_ref[...] = (y_ref[...].astype(jnp.float32) * scale_ref[0]).astype(out_ref.dtype)


def _sublane(dtype):
    # Sublane packing: 8 rows/vreg for 4-byte, 16 for 2-byte, 32 for 1-byte dtypes.
    return {4: 8, 2: 16, 1: 32}.get(jnp.dtype(dtype).itemsize, 8)


def _round_up(x, m):
    return ((x + m - 1) // m) * m


def _scaled_multiply_2d(y2d, scale_arr):
    """y2d * scale on a 2-D array, tiled over rows (and cols if D is huge)."""
    N, D = y2d.shape
    dtype = y2d.dtype
    itemsize = jnp.dtype(dtype).itemsize
    sub = _sublane(dtype)
    total_bytes = N * D * itemsize

    # Truly tiny tensors: one whole-array VMEM block, no grid / pipeline overhead.
    if total_bytes <= _TINY_BYTES:
        return pl.pallas_call(
            _scale_kernel,
            out_shape=jax.ShapeDtypeStruct((N, D), dtype),
            in_specs=[
                pl.BlockSpec(memory_space=pltpu.MemorySpace.SMEM),   # fp32 scale
                pl.BlockSpec(memory_space=pltpu.MemorySpace.VMEM),   # full y
            ],
            out_specs=pl.BlockSpec(memory_space=pltpu.MemorySpace.VMEM),
            input_output_aliases={1: 0},  # donate y -> output
        )(scale_arr, y2d)

    # Column tile: full D unless even a sublane-high strip of full D would blow
    # the block budget (huge-D guard); then tile D in multiples of 128.
    if sub * D * itemsize <= _TARGET_BLOCK_BYTES:
        tile_d = D
    else:
        tile_d = max(_LANE, (_TARGET_BLOCK_BYTES // (sub * itemsize * _LANE)) * _LANE)
        tile_d = min(tile_d, _round_up(D, _LANE))

    # Row tile: fill the byte budget, sublane-aligned, clamped to the row count.
    tile_n = max(sub, (_TARGET_BLOCK_BYTES // (tile_d * itemsize)) // sub * sub)
    tile_n = min(tile_n, _round_up(N, sub))

    # Keep >=2 grid steps for mid-size tensors so the "parallel" row axis can be
    # sharded across both TensorCores on v7x (no effect on v5e/v6e).
    if total_bytes > _MIN_TWO_STEP_BYTES and pl.cdiv(N, tile_n) < 2:
        tile_n = max(sub, _round_up(pl.cdiv(N, 2), sub))

    grid = (pl.cdiv(N, tile_n), pl.cdiv(D, tile_d))
    return pl.pallas_call(
        _scale_kernel,
        out_shape=jax.ShapeDtypeStruct((N, D), dtype),
        grid=grid,
        in_specs=[
            pl.BlockSpec(memory_space=pltpu.MemorySpace.SMEM),        # fp32 scale
            pl.BlockSpec((tile_n, tile_d), lambda i, j: (i, j)),      # y tiles
        ],
        out_specs=pl.BlockSpec((tile_n, tile_d), lambda i, j: (i, j)),
        input_output_aliases={1: 0},  # donate y -> output
        compiler_params=pltpu.CompilerParams(
            dimension_semantics=("parallel", "parallel"),
            vmem_limit_bytes=_VMEM_LIMIT_BYTES,
        ),
    )(scale_arr, y2d)


def scaling_factor_forward(x_ref, y, scale_factor):
    """Pallas implementation of ScalingFactor.forward(x_ref, y) = y * scale_factor.

    x_ref is unused at inference time (AutoScaleFit.observe is a no-op outside
    fitting mode / once fitted); kept for API parity.
    """
    del x_ref  # unused in (non-fitting) forward

    if not jnp.issubdtype(jnp.dtype(y.dtype), jnp.floating):
        # Integer/exotic dtypes: avoid f32-multiply-then-truncate surprises;
        # fall back to plain JAX with exact dtype semantics.
        return y * jnp.asarray(scale_factor, dtype=y.dtype)

    total = y.size
    if total == 0:
        return y

    scale_arr = jnp.asarray(scale_factor, dtype=jnp.float32).reshape((1,))
    orig_shape = y.shape

    # Lane-dense repack: fold the (contiguous, elementwise) tensor to a
    # multiple-of-128 last dim when the element count allows -> unmasked stores.
    for width in (512, 256, 128):
        if total % width == 0:
            out = _scaled_multiply_2d(y.reshape((total // width, width)), scale_arr)
            return out.reshape(orig_shape)

    # Fallback: natural (leading..., last) 2-D layout; a ragged last dim means
    # masked trailing stores (correct, slightly slower).
    last = orig_shape[-1] if y.ndim >= 2 else total
    out = _scaled_multiply_2d(y.reshape((total // last, last)), scale_arr)
    return out.reshape(orig_shape)


if __name__ == "__main__":
    key = jax.random.PRNGKey(0)
    k1, k2, k3, k4, k5 = jax.random.split(key, 5)

    # Case 1: small 2-D activation (tiny whole-array path, lane-dense repack
    # 8x32 -> 2x128), scale = 1.0 (init value).
    y1 = jax.random.normal(k1, (8, 32), dtype=jnp.float32)
    x1 = jax.random.normal(k2, (8, 32), dtype=jnp.float32)
    out1 = scaling_factor_forward(x1, y1, jnp.float32(1.0))
    jax.block_until_ready(out1)
    assert out1.shape == (8, 32)
    assert jnp.allclose(out1, y1, rtol=1e-6, atol=1e-6)

    # Case 2: bf16, odd feature dim (total not divisible by 128 -> fallback
    # masked-store path), fitted scale 0.37; multiply in fp32, cast on store.
    y2 = jax.random.normal(k3, (6, 40), dtype=jnp.bfloat16)
    exp2 = (y2.astype(jnp.float32) * 0.37).astype(jnp.bfloat16)
    out2 = scaling_factor_forward(None, y2, jnp.float32(0.37))
    jax.block_until_ready(out2)
    assert out2.dtype == jnp.bfloat16
    assert jnp.allclose(out2.astype(jnp.float32), exp2.astype(jnp.float32),
                        rtol=1e-2, atol=1e-2)

    # Case 3: 4-D tensor (2,4,16,16) -> repacked to (4,512), reshaped back.
    y3 = jax.random.normal(k4, (2, 4, 16, 16), dtype=jnp.float32)
    exp3 = y3 * 0.5
    out3 = scaling_factor_forward(None, y3, jnp.float32(0.5))
    jax.block_until_ready(out3)
    assert out3.shape == (2, 4, 16, 16)
    assert jnp.allclose(out3, exp3, rtol=1e-6, atol=1e-6)

    # Case 4: modest tensor above the tiny threshold -> gridded, lane-dense path.
    y4 = jax.random.normal(k5, (2304, 160), dtype=jnp.float32)  # ~1.4 MiB
    exp4 = y4 * 0.73
    out4 = scaling_factor_forward(None, y4, jnp.float32(0.73))
    jax.block_until_ready(out4)
    assert out4.shape == (2304, 160)
    assert jnp.allclose(out4, exp4, rtol=1e-6, atol=1e-6)

    print("KERNEL_OK")
</pallas_src>

<mosaic_0001>
module attributes {stable_mosaic.version = 11 : i64} {
  func.func @_scale_kernel(%arg0: memref<1xf32, #tpu.memory_space<smem>>, %arg1: memref<1x256xf32, #tpu.memory_space<vmem>>, %arg2: memref<1x256xf32, #tpu.memory_space<vmem>>) attributes {dimension_semantics = [], scalar_prefetch = 0 : i64, scratch_operands = 0 : i64, tpu.core_type = #tpu.core_type<tc>} {
    %c0 = arith.constant 0 : index
    %c0_0 = arith.constant 0 : index
    %0 = vector.load %arg1[%c0, %c0_0] : memref<1x256xf32, #tpu.memory_space<vmem>>, vector<1x256xf32>
    %c0_1 = arith.constant 0 : index
    %1 = memref.load %arg0[%c0_1] : memref<1xf32, #tpu.memory_space<smem>>
    %2 = vector.broadcast %1 : f32 to vector<1x256xf32>
    %3 = arith.mulf %0, %2 : vector<1x256xf32>
    %c0_2 = arith.constant 0 : index
    %c0_3 = arith.constant 0 : index
    %4 = vector.load %arg2[%c0_2, %c0_3] : memref<1x256xf32, #tpu.memory_space<vmem>>, vector<1x256xf32>
    tpu.vector_store %arg2[%c0_2, %c0_3], %3 {strides = array<i32>} : memref<1x256xf32, #tpu.memory_space<vmem>>, vector<1x256xf32>,
    return
  }
}

</mosaic_0001>

<llo_original>
// kernel: tpu_custom_call.1
$region0: #{tpu_custom_call.1}
  #allocation0 [shape = 'u32[]', space=smem, size = 0x4, offset = 0x4, fixed_abs, tag = 'smem constant byte address 0x4 - core index']
  #allocation1 [shape = 'u32[144,128]{1,0:T(1,128)}', space=vmem, size = 0x12000, scoped, tag = 'internal scratch']
  #allocation2 [shape = 'f32[1]{0:T(128)S(6)}', space=smem, size = 0x200, scoped, tag = 'scoped memory for tpu_custom_call.1']
  %s0 = inlined_call_operand.<no memory space> [shape: f32[1], index: 0, kind: input, shape index: {}]
  %s1 = inlined_call_operand.hbm [shape: f32[1,256], index: 1, kind: input, shape index: {}, may-alias: {1,2}]
  %s2 = inlined_call_operand.hbm [shape: f32[1,256], index: 2, kind: output, shape index: {}, may-alias: {1,2}]
  %s3 = sld [smem:[#allocation0]]
  $region22: #{tpu_custom_call.1} parent=0
    _
  %s5 = ssub.s32 1, %s3
  %s6 = scalar_select 0, %s5, %s3
  %7 = sst [smem:[#allocation2]] %s0
  $region1: #{tpu_custom_call.1} parent=0
    #allocation3 [shape = 'u8[1024]{0}', space=vmem, size = 0x400, scoped, tag = 'input window, operand 1, single buffered']
    #allocation4 [shape = 's32[1]{0}', space=sflag, size = 0x4, scoped, tag = 'scoped memory for tpu_custom_call.1']
    #allocation5 [shape = 's32[1]{0}', space=sflag, size = 0x4, scoped, tag = 'scoped memory for tpu_custom_call.1']
    #allocation6 [shape = 'u8[1024]{0}', space=vmem, size = 0x400, scoped, tag = 'output window, operand 0, single buffered']
    %8 = vsyncpa [#allocation4], 0
    %9 = vsyncpa [#allocation5], 0
    // Predicated region
    $region2: #{tpu_custom_call.1} parent=1 // pred_check
      _
    $region3: #{tpu_custom_call.1} parent=1 // pred_check_branch
      %11 = sbr.rel (0) target = $region5
    $region4: #{tpu_custom_call.1} parent=1 // pred_region
      _
    $region5: #{tpu_custom_call.1} parent=1 // pred_fallthru
      _
    // Predicated region
    $region6: #{tpu_custom_call.1} parent=1 // pred_check
      _
    $region7: #{tpu_custom_call.1} parent=1 // pred_check_branch
      %13 = sbr.rel (0) target = $region9
    $region8: #{tpu_custom_call.1} parent=1 // pred_region
      %s15 = ssub.s32 32, 32
      %16 = vsyncadd [#allocation4], %s15
      %s18 = sshll.u32 [#allocation3], 4
      %s19 = int_to_ptr.vmem [resolvable:$true] %s18
      %21 = dma.hbm_to_vmem [thread:$0]  %s1, 32, %s19, [#allocation4]
    $region9: #{tpu_custom_call.1} parent=1 // pred_fallthru
      _
    // Predicated region
    $region10: #{tpu_custom_call.1} parent=1 // pred_check
      _
    $region11: #{tpu_custom_call.1} parent=1 // pred_check_branch
      %23 = sbr.rel (0) target = $region13
    $region12: #{tpu_custom_call.1} parent=1 // pred_region
      %24 = dma.done [#allocation4], 32
    $region13: #{tpu_custom_call.1} parent=1 // pred_fallthru
      _
    %v25 = vld [vmem:[#allocation3] sm:$0x3]
    %s26 = sld [smem:[#allocation2]]
    %v27 = vstv %s26
    %v28 = vmul.f32 %v25, %v27
    %v29 = vlaneseq
    %vm30 = vcmp.ge.s32.totalorder %v29, 0
    %vm31 = vcmp.lt.s32.totalorder %v29, 256
    %vm32 = vmand %vm30, %vm31
    %33 = vst.msk [vmem:[#allocation6] sm:$0x3] %vm32, %v28
    // Predicated region
    $region14: #{tpu_custom_call.1} parent=1 // pred_check
      _
    $region15: #{tpu_custom_call.1} parent=1 // pred_check_branch
      %35 = sbr.rel (0) target = $region17
    $region16: #{tpu_custom_call.1} parent=1 // pred_region
      %s37 = ssub.s32 32, 32
      %38 = vsyncadd [#allocation5], %s37
      %s40 = sshll.u32 [#allocation6], 4
      %s41 = int_to_ptr.vmem [resolvable:$true] %s40
      %43 = dma.vmem_to_hbm [thread:$0]  %s41, 32, %s2, [#allocation5]
    $region17: #{tpu_custom_call.1} parent=1 // pred_fallthru
      _
    // Predicated region
    $region18: #{tpu_custom_call.1} parent=1 // pred_check
      _
    $region19: #{tpu_custom_call.1} parent=1 // pred_check_branch
      %45 = sbr.rel (0) target = $region21
    $region20: #{tpu_custom_call.1} parent=1 // pred_region
      %46 = dma.done [#allocation5], 32
    $region21: #{tpu_custom_call.1} parent=1 // pred_fallthru
      _
    %47 = vsyncpa [#allocation4], 1
    %48 = vsyncpa [#allocation5], 1

</llo_original>
